<compile_context>
chip_gen: v7x
topology: tpu7x:2x2x1
jax: 0.10.0
libtpu: 0.0.40
codegen_flags: <defaults>
</compile_context>

<pallas_src>
import jax
import jax.numpy as jnp
from jax.experimental import pallas as pl
from jax.experimental.pallas import tpu as pltpu


def _dml_loss_kernel(outputs_ref, targets_ref, row_kl_ref):
    """Per-row KL(p || q) for one (TILE_B, C) batch tile of logits."""
    o = outputs_ref[...].astype(jnp.float32)   # (TILE_B, C) "student" logits
    t = targets_ref[...].astype(jnp.float32)   # (TILE_B, C) "teacher" logits

    # log q = log_softmax(outputs, axis=1)
    o_shift = o - jnp.max(o, axis=1, keepdims=True)
    lse_o = jnp.log(jnp.sum(jnp.exp(o_shift), axis=1, keepdims=True))
    log_q = o_shift - lse_o

    # p = softmax(soft_targets, axis=1); log p computed without per-element div.
    t_shift = t - jnp.max(t, axis=1, keepdims=True)
    t_exp = jnp.exp(t_shift)
    t_sum = jnp.sum(t_exp, axis=1, keepdims=True)
    log_p = t_shift - jnp.log(t_sum)

    # sum_c p * (log p - log q) == (1 / t_sum) * sum_c t_exp * (log p - log q)
    inner = jnp.sum(t_exp * (log_p - log_q), axis=1, keepdims=True)  # (TILE_B, 1)
    row_kl_ref[...] = inner * pl.reciprocal(t_sum, approx=False)


def _pick_tile_b(batch, num_classes, itemsize,
                 target_block_bytes=4 * 1024 * 1024, max_tile=1024):
    """Largest batch tile with ~target_block_bytes per input block.

    2 inputs x 2 pipeline buffers x 4 MiB = 16 MiB of buffered inputs:
    comfortably inside the scoped VMEM on v5e/v6e and v7x (64 MiB physical).
    """
    # Sublane granularity: 8 rows for f32, 16 for bf16, 32 for 8-bit dtypes.
    sublane = 8 * max(1, 4 // max(int(itemsize), 1))
    rows = target_block_bytes // max(1, num_classes * int(itemsize))
    rows = max(sublane, min(rows, max_tile))
    if batch <= rows:
        return batch                      # single block covers the full batch
    return max(sublane, (rows // sublane) * sublane)


def dml_loss(outputs: jax.Array, soft_targets: jax.Array, *, tile_b=None) -> jax.Array:
    """Pallas TPU implementation of DMLLoss.forward.

    Args:
      outputs:      (B, C) logits (softmax axis = dim 1, the lane axis).
      soft_targets: (B, C) logits.
      tile_b:       optional batch-tile override (multiple of the sublane size).
    Returns:
      scalar float32 loss (KL(p || q) with 'batchmean' reduction).
    """
    assert outputs.shape == soft_targets.shape
    assert outputs.ndim == 2
    B, C = outputs.shape
    itemsize = jnp.dtype(outputs.dtype).itemsize

    if tile_b is None:
        tile_b = _pick_tile_b(B, C, itemsize)
    num_tiles = pl.cdiv(B, tile_b)

    cost = pl.CostEstimate(
        flops=10 * B * C,                         # shifts, mul-adds, row sums
        transcendentals=2 * B * C + 3 * B,        # 2 exp/elem + logs/recip per row
        bytes_accessed=2 * B * C * itemsize + B * 4,
    )

    row_kl = pl.pallas_call(
        _dml_loss_kernel,
        out_shape=jax.ShapeDtypeStruct((B, 1), jnp.float32),
        grid=(num_tiles,),
        in_specs=[
            pl.BlockSpec((tile_b, C), lambda i: (i, 0)),
            pl.BlockSpec((tile_b, C), lambda i: (i, 0)),
        ],
        out_specs=pl.BlockSpec((tile_b, 1), lambda i: (i, 0)),
        compiler_params=pltpu.CompilerParams(
            dimension_semantics=("parallel",),       # distinct out blocks => race-free
            vmem_limit_bytes=32 * 1024 * 1024,
        ),
        cost_estimate=cost,
    )(outputs, soft_targets)

    # 'batchmean': divide by the GLOBAL batch size; tiny B-element reduction
    # is left to XLA.
    return jnp.sum(row_kl) / jnp.float32(B)


if __name__ == "__main__":
    key = jax.random.PRNGKey(0)

    def reference(o, t):
        log_q = jax.nn.log_softmax(o, axis=1)
        p = jax.nn.softmax(t, axis=1)
        return jnp.sum(p * (jnp.log(p) - log_q)) / o.shape[0]

    # Small shapes consistent with the module: (batch, num_classes).
    k1, k2 = jax.random.split(key)
    B, C = 8, 32
    outputs = jax.random.normal(k1, (B, C), dtype=jnp.float32)
    soft_targets = jax.random.normal(k2, (B, C), dtype=jnp.float32)

    loss = dml_loss(outputs, soft_targets)
    jax.block_until_ready(loss)
    ref = reference(outputs, soft_targets)
    assert jnp.allclose(loss, ref, rtol=1e-5, atol=1e-5), (loss, ref)

    # Exercise the multi-tile "parallel" grid path with a ragged last block.
    k3, k4 = jax.random.split(k2)
    B2, C2 = 50, 256
    outputs2 = jax.random.normal(k3, (B2, C2), dtype=jnp.float32)
    soft_targets2 = jax.random.normal(k4, (B2, C2), dtype=jnp.float32)

    loss2 = dml_loss(outputs2, soft_targets2, tile_b=16)
    jax.block_until_ready(loss2)
    ref2 = reference(outputs2, soft_targets2)
    assert jnp.allclose(loss2, ref2, rtol=1e-5, atol=1e-5), (loss2, ref2)

    print("KERNEL_OK")
</pallas_src>

<mosaic_0001>
module attributes {stable_mosaic.version = 11 : i64} {
  func.func @_dml_loss_kernel(%arg0: i32, %arg1: memref<8x32xf32, #tpu.memory_space<vmem>>, %arg2: memref<8x32xf32, #tpu.memory_space<vmem>>, %arg3: memref<8x1xf32, #tpu.memory_space<vmem>>) attributes {dimension_semantics = [#tpu.dimension_semantics<parallel>], iteration_bounds = array<i64: 1>, scalar_prefetch = 0 : i64, scratch_operands = 0 : i64, tpu.core_type = #tpu.core_type<tc>, window_params = [{transform_indices = @transform_0, window_bounds = array<i64: 8, 32>}, {transform_indices = @transform_1, window_bounds = array<i64: 8, 32>}, {transform_indices = @transform_2, window_bounds = array<i64: 8, 1>}]} {
    %c0 = arith.constant 0 : index
    %c0_0 = arith.constant 0 : index
    %0 = vector.load %arg1[%c0, %c0_0] : memref<8x32xf32, #tpu.memory_space<vmem>>, vector<8x32xf32>
    %c0_1 = arith.constant 0 : index
    %c0_2 = arith.constant 0 : index
    %1 = vector.load %arg2[%c0_1, %c0_2] : memref<8x32xf32, #tpu.memory_space<vmem>>, vector<8x32xf32>
    %cst = arith.constant dense<0xFF800000> : vector<8xf32>
    %2 = vector.multi_reduction <maximumf>, %0, %cst [1] : vector<8x32xf32> to vector<8xf32>
    %3 = vector.shape_cast %2 : vector<8xf32> to vector<8x1xf32>
    %4 = vector.broadcast %3 : vector<8x1xf32> to vector<8x32xf32>
    %5 = arith.subf %0, %4 : vector<8x32xf32>
    %6 = math.exp %5 : vector<8x32xf32>
    %cst_3 = arith.constant dense<0.000000e+00> : vector<8xf32>
    %7 = vector.multi_reduction <add>, %6, %cst_3 [1] : vector<8x32xf32> to vector<8xf32>
    %8 = vector.shape_cast %7 : vector<8xf32> to vector<8x1xf32>
    %9 = math.log %8 : vector<8x1xf32>
    %10 = vector.broadcast %9 : vector<8x1xf32> to vector<8x32xf32>
    %11 = arith.subf %5, %10 : vector<8x32xf32>
    %cst_4 = arith.constant dense<0xFF800000> : vector<8xf32>
    %12 = vector.multi_reduction <maximumf>, %1, %cst_4 [1] : vector<8x32xf32> to vector<8xf32>
    %13 = vector.shape_cast %12 : vector<8xf32> to vector<8x1xf32>
    %14 = vector.broadcast %13 : vector<8x1xf32> to vector<8x32xf32>
    %15 = arith.subf %1, %14 : vector<8x32xf32>
    %16 = math.exp %15 : vector<8x32xf32>
    %cst_5 = arith.constant dense<0.000000e+00> : vector<8xf32>
    %17 = vector.multi_reduction <add>, %16, %cst_5 [1] : vector<8x32xf32> to vector<8xf32>
    %18 = vector.shape_cast %17 : vector<8xf32> to vector<8x1xf32>
    %19 = math.log %18 : vector<8x1xf32>
    %20 = vector.broadcast %19 : vector<8x1xf32> to vector<8x32xf32>
    %21 = arith.subf %15, %20 : vector<8x32xf32>
    %22 = arith.subf %21, %11 : vector<8x32xf32>
    %23 = arith.mulf %16, %22 : vector<8x32xf32>
    %cst_6 = arith.constant dense<0.000000e+00> : vector<8xf32>
    %24 = vector.multi_reduction <add>, %23, %cst_6 [1] : vector<8x32xf32> to vector<8xf32>
    %25 = vector.shape_cast %24 : vector<8xf32> to vector<8x1xf32>
    %26 = tpu.reciprocal %18 : vector<8x1xf32> -> vector<8x1xf32>
    %27 = arith.mulf %25, %26 : vector<8x1xf32>
    %c0_7 = arith.constant 0 : index
    %c0_8 = arith.constant 0 : index
    %28 = vector.load %arg3[%c0_7, %c0_8] : memref<8x1xf32, #tpu.memory_space<vmem>>, vector<8x1xf32>
    tpu.vector_store %arg3[%c0_7, %c0_8], %27 {strides = array<i32>} : memref<8x1xf32, #tpu.memory_space<vmem>>, vector<8x1xf32>,
    return
  }
  func.func @transform_0(%arg0: i32) -> (i32, i32) {
    %c0_i32 = arith.constant 0 : i32
    %c0_i32_0 = arith.constant 0 : i32
    return %arg0, %c0_i32 : i32, i32
  }
  func.func @transform_1(%arg0: i32) -> (i32, i32) {
    %c0_i32 = arith.constant 0 : i32
    %c0_i32_0 = arith.constant 0 : i32
    return %arg0, %c0_i32 : i32, i32
  }
  func.func @transform_2(%arg0: i32) -> (i32, i32) {
    %c0_i32 = arith.constant 0 : i32
    %c0_i32_0 = arith.constant 0 : i32
    return %arg0, %c0_i32 : i32, i32
  }
}

</mosaic_0001>

<llo_original>
// kernel: tpu_custom_call.1
$region0: #{tpu_custom_call.1}
  #allocation0 [shape = 'u32[]', space=smem, size = 0x4, offset = 0x4, fixed_abs, tag = 'smem constant byte address 0x4 - core index']
  #allocation1 [shape = 'u32[144,128]{1,0:T(1,128)}', space=vmem, size = 0x12000, scoped, tag = 'internal scratch']
  %s0 = inlined_call_operand.hbm [shape: f32[8,32], index: 0, kind: input, shape index: {}]
  %s1 = inlined_call_operand.hbm [shape: f32[8,32], index: 1, kind: input, shape index: {}]
  %s2 = inlined_call_operand.vmem [shape: f32[8,1], index: 2, kind: output, shape index: {}]
  %s3 = sld [smem:[#allocation0]]
  $region26: #{tpu_custom_call.1} parent=0
    _
  %s5 = ssub.s32 1, %s3
  %s6 = scalar_select 0, %s5, %s3
  $region1: #{tpu_custom_call.1} parent=0
    #allocation2 [shape = 'u8[4096]{0}', space=vmem, size = 0x1000, scoped, tag = 'input window, operand 0, single buffered']
    #allocation3 [shape = 's32[1]{0}', space=sflag, size = 0x4, scoped, tag = 'scoped memory for tpu_custom_call.1']
    #allocation4 [shape = 'u8[4096]{0}', space=vmem, size = 0x1000, scoped, tag = 'input window, operand 1, single buffered']
    #allocation5 [shape = 's32[1]{0}', space=sflag, size = 0x4, scoped, tag = 'scoped memory for tpu_custom_call.1']
    %7 = vsyncpa [#allocation3], 0
    %8 = vsyncpa [#allocation5], 0
    // Predicated region
    $region2: #{tpu_custom_call.1} parent=1 // pred_check
      _
    $region3: #{tpu_custom_call.1} parent=1 // pred_check_branch
      %10 = sbr.rel (0) target = $region5
    $region4: #{tpu_custom_call.1} parent=1 // pred_region
      %s12 = ssub.s32 128, 128
      %13 = vsyncadd [#allocation3], %s12
      %s15 = sshll.u32 [#allocation2], 4
      %s16 = int_to_ptr.vmem [resolvable:$true] %s15
      %18 = dma.hbm_to_vmem [thread:$0]  %s0, 128, %s16, [#allocation3]
    $region5: #{tpu_custom_call.1} parent=1 // pred_fallthru
      _
    // Predicated region
    $region6: #{tpu_custom_call.1} parent=1 // pred_check
      _
    $region7: #{tpu_custom_call.1} parent=1 // pred_check_branch
      %20 = sbr.rel (0) target = $region9
    $region8: #{tpu_custom_call.1} parent=1 // pred_region
      %s22 = ssub.s32 128, 128
      %23 = vsyncadd [#allocation5], %s22
      %s25 = sshll.u32 [#allocation4], 4
      %s26 = int_to_ptr.vmem [resolvable:$true] %s25
      %28 = dma.hbm_to_vmem [thread:$0]  %s1, 128, %s26, [#allocation5]
    $region9: #{tpu_custom_call.1} parent=1 // pred_fallthru
      _
    // Predicated region
    $region10: #{tpu_custom_call.1} parent=1 // pred_check
      _
    $region11: #{tpu_custom_call.1} parent=1 // pred_check_branch
      %30 = sbr.rel (0) target = $region13
    $region12: #{tpu_custom_call.1} parent=1 // pred_region
      %31 = dma.done [#allocation3], 128
    $region13: #{tpu_custom_call.1} parent=1 // pred_fallthru
      _
    // Predicated region
    $region14: #{tpu_custom_call.1} parent=1 // pred_check
      _
    $region15: #{tpu_custom_call.1} parent=1 // pred_check_branch
      %33 = sbr.rel (0) target = $region17
    $region16: #{tpu_custom_call.1} parent=1 // pred_region
      %34 = dma.done [#allocation5], 128
    $region17: #{tpu_custom_call.1} parent=1 // pred_fallthru
      _
    %v35 = vld [vmem:[#allocation2] sm:$0xff]
    %v36 = vld [vmem:[#allocation4] sm:$0xff]
    %vm37 = vcmask 261120
    %v38 = vsel %vm37, %v35, -inf
    %39 = vmax.xlane.f32.xlu0 %v38
    %v40 = vpop.xlane.xlu0 %39
    %v41 = vsub.f32 %v35, %v40
    %v42 = vmul.f32 %v41, 1.442695
    %v43 = vpow.pop %v42
    %v44 = vsel %vm37, %v43, 0.0
    %45 = vadd.xlane.f32.xlu0 %v44
    %v46 = vpop.xlane.xlu0 %45
    %v47 = vlog2.pop %v46
    %v48 = vmul.f32 %v47, 0.6931472
    %v49 = vsub.f32 %v41, %v48
    %v50 = vsel %vm37, %v36, -inf
    %51 = vmax.xlane.f32.xlu0 %v50
    %v52 = vpop.xlane.xlu0 %51
    %v53 = vsub.f32 %v36, %v52
    %v54 = vmul.f32 %v53, 1.442695
    %v55 = vpow.pop %v54
    %v56 = vsel %vm37, %v55, 0.0
    %57 = vadd.xlane.f32.xlu0 %v56
    %v58 = vpop.xlane.xlu0 %57
    %v59 = vlog2.pop %v58
    %v60 = vmul.f32 %v59, 0.6931472
    %v61 = vsub.f32 %v53, %v60
    %v62 = vsub.f32 %v61, %v49
    %v63 = vmul.f32 %v55, %v62
    %v64 = vsel %vm37, %v63, 0.0
    %65 = vadd.xlane.f32.xlu0 %v64
    %v66 = vpop.xlane.xlu0 %65
    %v67 = vrcp.pop %v58
    %v68 = vmul.f32 %v66, %v67
    %vm69 = vcmask 7168
    %70 = vst.msk [vmem:[%s2] sm:$0xff] %vm69, %v68
    // Predicated region
    $region18: #{tpu_custom_call.1} parent=1 // pred_check
      _
    $region19: #{tpu_custom_call.1} parent=1 // pred_check_branch
      %72 = sbr.rel (0) target = $region21
    $region20: #{tpu_custom_call.1} parent=1 // pred_region
      _
    $region21: #{tpu_custom_call.1} parent=1 // pred_fallthru
      _
    // Predicated region
    $region22: #{tpu_custom_call.1} parent=1 // pred_check
      _
    $region23: #{tpu_custom_call.1} parent=1 // pred_check_branch
      %74 = sbr.rel (0) target = $region25
    $region24: #{tpu_custom_call.1} parent=1 // pred_region
      _
    $region25: #{tpu_custom_call.1} parent=1 // pred_fallthru
      _
    %75 = vsyncpa [#allocation3], 1
    %76 = vsyncpa [#allocation5], 1

</llo_original>
